<compile_context>
chip_gen: v7x
topology: tpu7x:2x2x1
jax: 0.10.0
libtpu: 0.0.40
codegen_flags: <defaults>
</compile_context>

<pallas_src>
import jax
import jax.numpy as jnp
from jax import lax
from jax.experimental import pallas as pl
from jax.experimental.pallas import tpu as pltpu


_HIDDEN_PAD = 32  # hidden widths (21 / 14 / encoding_dim) padded up to 32


def _round_up(x, m):
    return ((x + m - 1) // m) * m


def _autoencoder_kernel(
    x_ref,                          # (bt, D_in)  natural batch-major layout
    w1, b1, w2, b2, w3, b3,         # encoder params (out, in) bf16 / (out, 1) f32
    w4, b4, w5, b5, w6, b6,         # decoder params
    out_ref,                        # (bt, D_in)
):
    """Fused 6-layer MLP forward on one batch tile.

    Internally activations are kept (features, batch) so the batch sits on the
    lane axis: matmuls feed the MXU's N dimension with the batch and all
    bias/ReLU/sigmoid element-wise work is fully lane-dense.  The entry
    "transpose" is fused into the first matmul via NT dimension numbers; the
    exit transpose runs on the otherwise-idle XLU.
    """
    x = x_ref[...].astype(jnp.bfloat16)                       # (bt, D_in)

    # Layer 1: contract feature axes of W1 (out, in) and x (bt, in) -> (out, bt).
    h = lax.dot_general(
        w1[...], x,
        dimension_numbers=(((1,), (1,)), ((), ())),           # "NT" matmul
        preferred_element_type=jnp.float32)
    h = jnp.maximum(h + b1[...], 0.0)                         # f32 element-wise

    def layer(h, w_ref, b_ref, relu):
        acc = jnp.dot(w_ref[...], h.astype(jnp.bfloat16),
                      preferred_element_type=jnp.float32)     # (out, bt)
        acc = acc + b_ref[...]                                # + (out, 1)
        return jnp.maximum(acc, 0.0) if relu else acc

    # ---- rest of encoder ----
    h = layer(h, w2, b2, True)
    h = layer(h, w3, b3, True)
    # ---- decoder ----
    h = layer(h, w4, b4, True)
    h = layer(h, w5, b5, True)
    h = layer(h, w6, b6, False)                               # (D_in, bt)

    # Sigmoid on the lane-dense layout: exp + approx reciprocal, both EUP.
    y = pl.reciprocal(1.0 + jnp.exp(-h), approx=True)

    # Back to the natural (batch, features) layout for the store (XLU).
    out_ref[...] = y.T.astype(out_ref.dtype)


def prepare_params(params):
    """Pad hidden widths to multiples of 32, cast weights to bf16.

    params: list of (W, b) in PyTorch layout: W (out, in), b (out,), f32.
    Zero padding is exact: padded output rows are 0, ReLU(0)=0, and the next
    layer's padded input columns are 0, so padded rows contribute nothing.
    """
    n = len(params)
    flat = []
    for idx, (w, b) in enumerate(params):
        out_f, in_f = w.shape
        out_p = out_f if idx == n - 1 else _round_up(out_f, _HIDDEN_PAD)
        in_p = in_f if idx == 0 else _round_up(in_f, _HIDDEN_PAD)
        w_p = jnp.zeros((out_p, in_p), jnp.float32).at[:out_f, :in_f].set(w)
        b_p = jnp.zeros((out_p, 1), jnp.float32).at[:out_f, 0].set(b)
        flat.append(w_p.astype(jnp.bfloat16))
        flat.append(b_p)
    return flat


def _choose_batch_tile(B):
    """Batch-tile (row-tile) heuristic.

    Small batches: one tile.  Large batches: an EVEN number of tiles (so both
    v7x TensorCores get equal work under dimension_semantics=("parallel",)),
    each at most 4096 rows (per-grid-step overhead amortized, working set
    still only a few MiB of VMEM), 8-aligned so ragged batches need little or
    no padding.
    """
    if B <= 256:
        return B                       # single tile; block == full array
    n_tiles = max(2, -(-B // 4096))    # ceil(B / 4096), at least 2
    if n_tiles % 2:
        n_tiles += 1                   # even tile count for v7x megacore
    return _round_up(-(-B // n_tiles), 8)


def autoencoder_forward(x, params, *, batch_tile=None):
    """Fused Pallas forward pass.

    x: (B, D_in) float32 (standard PyTorch layout).
    params: list of (W, b) pairs in PyTorch layout (W: (out, in), b: (out,)).
    Returns (B, D_in) float32.
    """
    B, D_in = x.shape
    bt = batch_tile if batch_tile is not None else _choose_batch_tile(B)
    b_pad = _round_up(B, bt)
    # Only pad when the tile does not divide the batch (costs one extra pass;
    # avoided for the common case by the 8-aligned tile choice above).
    x_in = x if b_pad == B else jnp.pad(x, ((0, b_pad - B), (0, 0)))

    flat = prepare_params(params)

    # Weights/biases are tiny and grid-invariant: a constant index_map keeps
    # the resident copy instead of re-DMAing every grid step.
    param_specs = [pl.BlockSpec(a.shape, lambda i: (0, 0)) for a in flat]

    out = pl.pallas_call(
        _autoencoder_kernel,
        out_shape=jax.ShapeDtypeStruct((b_pad, D_in), x.dtype),
        grid_spec=pltpu.PrefetchScalarGridSpec(
            num_scalar_prefetch=0,
            grid=(b_pad // bt,),
            in_specs=[pl.BlockSpec((bt, D_in), lambda i: (i, 0))] + param_specs,
            out_specs=pl.BlockSpec((bt, D_in), lambda i: (i, 0)),
        ),
        compiler_params=pltpu.CompilerParams(
            dimension_semantics=("parallel",),
            # Few-MiB footprint even at bt=4096; cap stays well under v7x's
            # 64 MiB physical VMEM while leaving double-buffer headroom.
            vmem_limit_bytes=32 * 1024 * 1024,
        ),
    )(x_in, *flat)

    return out if b_pad == B else out[:B]


def init_params(key, input_dim, encoding_dim):
    """PyTorch nn.Linear default init: U[-1/sqrt(fan_in), +1/sqrt(fan_in)]."""
    dims = [input_dim, 21, 14, encoding_dim, 14, 21, input_dim]
    params = []
    for fan_in, fan_out in zip(dims[:-1], dims[1:]):
        key, kw, kb = jax.random.split(key, 3)
        bound = 1.0 / (fan_in ** 0.5)
        w = jax.random.uniform(kw, (fan_out, fan_in), jnp.float32,
                               minval=-bound, maxval=bound)
        b = jax.random.uniform(kb, (fan_out,), jnp.float32,
                               minval=-bound, maxval=bound)
        params.append((w, b))
    return params


def reference_forward_f32(x, params):
    """Pure-f32 JAX reference (PyTorch semantics)."""
    h = x
    n = len(params)
    for idx, (w, b) in enumerate(params):
        h = h @ w.T + b
        h = jnp.maximum(h, 0.0) if idx < n - 1 else jax.nn.sigmoid(h)
    return h


def reference_forward_bf16(x, params):
    """Reference matching the kernel numerics: bf16 MXU inputs, f32 accum."""
    h = x
    n = len(params)
    for idx, (w, b) in enumerate(params):
        acc = jnp.dot(h.astype(jnp.bfloat16), w.T.astype(jnp.bfloat16),
                      preferred_element_type=jnp.float32) + b
        h = jnp.maximum(acc, 0.0) if idx < n - 1 else jax.nn.sigmoid(acc)
    return h


if __name__ == "__main__":
    input_dim = 32
    encoding_dim = 8
    batch = 16

    key = jax.random.PRNGKey(0)
    key, kx = jax.random.split(key)
    x = jax.random.uniform(kx, (batch, input_dim), jnp.float32)
    params = init_params(key, input_dim, encoding_dim)

    # Small toy batch: single tile, grid = (1,).
    out = jax.block_until_ready(autoencoder_forward(x, params))
    assert out.shape == (batch, input_dim)
    assert jnp.max(jnp.abs(out - reference_forward_bf16(x, params))) < 5e-3
    assert jnp.max(jnp.abs(out - reference_forward_f32(x, params))) < 5e-2

    # Also exercise the realistic multi-tile config (even grid = 2, bt = 256).
    big_b = 512
    key, kb = jax.random.split(key)
    xb = jax.random.uniform(kb, (big_b, input_dim), jnp.float32)
    out_b = jax.block_until_ready(autoencoder_forward(xb, params))
    assert out_b.shape == (big_b, input_dim)
    assert jnp.max(jnp.abs(out_b - reference_forward_bf16(xb, params))) < 5e-3

    print("KERNEL_OK")
</pallas_src>

<mosaic_0001>
module attributes {stable_mosaic.version = 11 : i64} {
  func.func @_autoencoder_kernel(%arg0: i32, %arg1: memref<16x32xf32, #tpu.memory_space<vmem>>, %arg2: memref<32x32xbf16, #tpu.memory_space<vmem>>, %arg3: memref<32x1xf32, #tpu.memory_space<vmem>>, %arg4: memref<32x32xbf16, #tpu.memory_space<vmem>>, %arg5: memref<32x1xf32, #tpu.memory_space<vmem>>, %arg6: memref<32x32xbf16, #tpu.memory_space<vmem>>, %arg7: memref<32x1xf32, #tpu.memory_space<vmem>>, %arg8: memref<32x32xbf16, #tpu.memory_space<vmem>>, %arg9: memref<32x1xf32, #tpu.memory_space<vmem>>, %arg10: memref<32x32xbf16, #tpu.memory_space<vmem>>, %arg11: memref<32x1xf32, #tpu.memory_space<vmem>>, %arg12: memref<32x32xbf16, #tpu.memory_space<vmem>>, %arg13: memref<32x1xf32, #tpu.memory_space<vmem>>, %arg14: memref<16x32xf32, #tpu.memory_space<vmem>>) attributes {dimension_semantics = [#tpu.dimension_semantics<parallel>], iteration_bounds = array<i64: 1>, scalar_prefetch = 0 : i64, scratch_operands = 0 : i64, tpu.core_type = #tpu.core_type<tc>, window_params = [{transform_indices = @transform_0, window_bounds = array<i64: 16, 32>}, {pipeline_mode = #tpu.pipeline_mode<synchronous>, transform_indices = @transform_1, window_bounds = array<i64: 32, 32>}, {pipeline_mode = #tpu.pipeline_mode<synchronous>, transform_indices = @transform_2, window_bounds = array<i64: 32, 1>}, {pipeline_mode = #tpu.pipeline_mode<synchronous>, transform_indices = @transform_3, window_bounds = array<i64: 32, 32>}, {pipeline_mode = #tpu.pipeline_mode<synchronous>, transform_indices = @transform_4, window_bounds = array<i64: 32, 1>}, {pipeline_mode = #tpu.pipeline_mode<synchronous>, transform_indices = @transform_5, window_bounds = array<i64: 32, 32>}, {pipeline_mode = #tpu.pipeline_mode<synchronous>, transform_indices = @transform_6, window_bounds = array<i64: 32, 1>}, {pipeline_mode = #tpu.pipeline_mode<synchronous>, transform_indices = @transform_7, window_bounds = array<i64: 32, 32>}, {pipeline_mode = #tpu.pipeline_mode<synchronous>, transform_indices = @transform_8, window_bounds = array<i64: 32, 1>}, {pipeline_mode = #tpu.pipeline_mode<synchronous>, transform_indices = @transform_9, window_bounds = array<i64: 32, 32>}, {pipeline_mode = #tpu.pipeline_mode<synchronous>, transform_indices = @transform_10, window_bounds = array<i64: 32, 1>}, {pipeline_mode = #tpu.pipeline_mode<synchronous>, transform_indices = @transform_11, window_bounds = array<i64: 32, 32>}, {pipeline_mode = #tpu.pipeline_mode<synchronous>, transform_indices = @transform_12, window_bounds = array<i64: 32, 1>}, {transform_indices = @transform_13, window_bounds = array<i64: 16, 32>}]} {
    %c0 = arith.constant 0 : index
    %c0_0 = arith.constant 0 : index
    %0 = vector.load %arg1[%c0, %c0_0] : memref<16x32xf32, #tpu.memory_space<vmem>>, vector<16x32xf32>
    %1 = arith.truncf %0 : vector<16x32xf32> to vector<16x32xbf16>
    %c0_1 = arith.constant 0 : index
    %c0_2 = arith.constant 0 : index
    %2 = vector.load %arg2[%c0_1, %c0_2] : memref<32x32xbf16, #tpu.memory_space<vmem>>, vector<32x32xbf16>
    %cst = arith.constant dense<0.000000e+00> : vector<32x16xf32>
    %3 = tpu.matmul %2, %1, %cst {dimension_numbers = #tpu.dot_dimension_numbers<[1], [1], [0], [0], [0, 0, 1, 0], [], []>} : vector<32x32xbf16>, vector<16x32xbf16>, vector<32x16xf32> -> vector<32x16xf32>
    %c0_3 = arith.constant 0 : index
    %c0_4 = arith.constant 0 : index
    %4 = vector.load %arg3[%c0_3, %c0_4] : memref<32x1xf32, #tpu.memory_space<vmem>>, vector<32x1xf32>
    %5 = vector.broadcast %4 : vector<32x1xf32> to vector<32x16xf32>
    %6 = arith.addf %3, %5 : vector<32x16xf32>
    %cst_5 = arith.constant 0.000000e+00 : f32
    %7 = vector.broadcast %cst_5 : f32 to vector<32x16xf32>
    %8 = arith.maximumf %6, %7 : vector<32x16xf32>
    %c0_6 = arith.constant 0 : index
    %c0_7 = arith.constant 0 : index
    %9 = vector.load %arg4[%c0_6, %c0_7] : memref<32x32xbf16, #tpu.memory_space<vmem>>, vector<32x32xbf16>
    %10 = arith.truncf %8 : vector<32x16xf32> to vector<32x16xbf16>
    %cst_8 = arith.constant dense<0.000000e+00> : vector<32x16xf32>
    %11 = tpu.matmul %9, %10, %cst_8 {dimension_numbers = #tpu.dot_dimension_numbers<[1], [0], [0], [1], [0, 0, 1, 1], [], []>} : vector<32x32xbf16>, vector<32x16xbf16>, vector<32x16xf32> -> vector<32x16xf32>
    %c0_9 = arith.constant 0 : index
    %c0_10 = arith.constant 0 : index
    %12 = vector.load %arg5[%c0_9, %c0_10] : memref<32x1xf32, #tpu.memory_space<vmem>>, vector<32x1xf32>
    %13 = vector.broadcast %12 : vector<32x1xf32> to vector<32x16xf32>
    %14 = arith.addf %11, %13 : vector<32x16xf32>
    %cst_11 = arith.constant 0.000000e+00 : f32
    %15 = vector.broadcast %cst_11 : f32 to vector<32x16xf32>
    %16 = arith.maximumf %14, %15 : vector<32x16xf32>
    %c0_12 = arith.constant 0 : index
    %c0_13 = arith.constant 0 : index
    %17 = vector.load %arg6[%c0_12, %c0_13] : memref<32x32xbf16, #tpu.memory_space<vmem>>, vector<32x32xbf16>
    %18 = arith.truncf %16 : vector<32x16xf32> to vector<32x16xbf16>
    %cst_14 = arith.constant dense<0.000000e+00> : vector<32x16xf32>
    %19 = tpu.matmul %17, %18, %cst_14 {dimension_numbers = #tpu.dot_dimension_numbers<[1], [0], [0], [1], [0, 0, 1, 1], [], []>} : vector<32x32xbf16>, vector<32x16xbf16>, vector<32x16xf32> -> vector<32x16xf32>
    %c0_15 = arith.constant 0 : index
    %c0_16 = arith.constant 0 : index
    %20 = vector.load %arg7[%c0_15, %c0_16] : memref<32x1xf32, #tpu.memory_space<vmem>>, vector<32x1xf32>
    %21 = vector.broadcast %20 : vector<32x1xf32> to vector<32x16xf32>
    %22 = arith.addf %19, %21 : vector<32x16xf32>
    %cst_17 = arith.constant 0.000000e+00 : f32
    %23 = vector.broadcast %cst_17 : f32 to vector<32x16xf32>
    %24 = arith.maximumf %22, %23 : vector<32x16xf32>
    %c0_18 = arith.constant 0 : index
    %c0_19 = arith.constant 0 : index
    %25 = vector.load %arg8[%c0_18, %c0_19] : memref<32x32xbf16, #tpu.memory_space<vmem>>, vector<32x32xbf16>
    %26 = arith.truncf %24 : vector<32x16xf32> to vector<32x16xbf16>
    %cst_20 = arith.constant dense<0.000000e+00> : vector<32x16xf32>
    %27 = tpu.matmul %25, %26, %cst_20 {dimension_numbers = #tpu.dot_dimension_numbers<[1], [0], [0], [1], [0, 0, 1, 1], [], []>} : vector<32x32xbf16>, vector<32x16xbf16>, vector<32x16xf32> -> vector<32x16xf32>
    %c0_21 = arith.constant 0 : index
    %c0_22 = arith.constant 0 : index
    %28 = vector.load %arg9[%c0_21, %c0_22] : memref<32x1xf32, #tpu.memory_space<vmem>>, vector<32x1xf32>
    %29 = vector.broadcast %28 : vector<32x1xf32> to vector<32x16xf32>
    %30 = arith.addf %27, %29 : vector<32x16xf32>
    %cst_23 = arith.constant 0.000000e+00 : f32
    %31 = vector.broadcast %cst_23 : f32 to vector<32x16xf32>
    %32 = arith.maximumf %30, %31 : vector<32x16xf32>
    %c0_24 = arith.constant 0 : index
    %c0_25 = arith.constant 0 : index
    %33 = vector.load %arg10[%c0_24, %c0_25] : memref<32x32xbf16, #tpu.memory_space<vmem>>, vector<32x32xbf16>
    %34 = arith.truncf %32 : vector<32x16xf32> to vector<32x16xbf16>
    %cst_26 = arith.constant dense<0.000000e+00> : vector<32x16xf32>
    %35 = tpu.matmul %33, %34, %cst_26 {dimension_numbers = #tpu.dot_dimension_numbers<[1], [0], [0], [1], [0, 0, 1, 1], [], []>} : vector<32x32xbf16>, vector<32x16xbf16>, vector<32x16xf32> -> vector<32x16xf32>
    %c0_27 = arith.constant 0 : index
    %c0_28 = arith.constant 0 : index
    %36 = vector.load %arg11[%c0_27, %c0_28] : memref<32x1xf32, #tpu.memory_space<vmem>>, vector<32x1xf32>
    %37 = vector.broadcast %36 : vector<32x1xf32> to vector<32x16xf32>
    %38 = arith.addf %35, %37 : vector<32x16xf32>
    %cst_29 = arith.constant 0.000000e+00 : f32
    %39 = vector.broadcast %cst_29 : f32 to vector<32x16xf32>
    %40 = arith.maximumf %38, %39 : vector<32x16xf32>
    %c0_30 = arith.constant 0 : index
    %c0_31 = arith.constant 0 : index
    %41 = vector.load %arg12[%c0_30, %c0_31] : memref<32x32xbf16, #tpu.memory_space<vmem>>, vector<32x32xbf16>
    %42 = arith.truncf %40 : vector<32x16xf32> to vector<32x16xbf16>
    %cst_32 = arith.constant dense<0.000000e+00> : vector<32x16xf32>
    %43 = tpu.matmul %41, %42, %cst_32 {dimension_numbers = #tpu.dot_dimension_numbers<[1], [0], [0], [1], [0, 0, 1, 1], [], []>} : vector<32x32xbf16>, vector<32x16xbf16>, vector<32x16xf32> -> vector<32x16xf32>
    %c0_33 = arith.constant 0 : index
    %c0_34 = arith.constant 0 : index
    %44 = vector.load %arg13[%c0_33, %c0_34] : memref<32x1xf32, #tpu.memory_space<vmem>>, vector<32x1xf32>
    %45 = vector.broadcast %44 : vector<32x1xf32> to vector<32x16xf32>
    %46 = arith.addf %43, %45 : vector<32x16xf32>
    %cst_35 = arith.constant 0.000000e+00 : f32
    %47 = vector.broadcast %cst_35 : f32 to vector<32x16xf32>
    %48 = arith.subf %47, %46 : vector<32x16xf32>
    %49 = math.exp %48 : vector<32x16xf32>
    %cst_36 = arith.constant 1.000000e+00 : f32
    %50 = vector.broadcast %cst_36 : f32 to vector<32x16xf32>
    %51 = arith.addf %50, %49 : vector<32x16xf32>
    %52 = tpu.reciprocal %51 {approx = true} : vector<32x16xf32> -> vector<32x16xf32>
    %53 = tpu.transpose %52, [1, 0] : vector<32x16xf32> -> vector<16x32xf32>
    %c0_37 = arith.constant 0 : index
    %c0_38 = arith.constant 0 : index
    %54 = vector.load %arg14[%c0_37, %c0_38] : memref<16x32xf32, #tpu.memory_space<vmem>>, vector<16x32xf32>
    tpu.vector_store %arg14[%c0_37, %c0_38], %53 {strides = array<i32>} : memref<16x32xf32, #tpu.memory_space<vmem>>, vector<16x32xf32>,
    return
  }
  func.func @transform_0(%arg0: i32) -> (i32, i32) {
    %c0_i32 = arith.constant 0 : i32
    %c0_i32_0 = arith.constant 0 : i32
    return %arg0, %c0_i32 : i32, i32
  }
  func.func @transform_1(%arg0: i32) -> (i32, i32) {
    %c0_i32 = arith.constant 0 : i32
    %c0_i32_0 = arith.constant 0 : i32
    %c0_i32_1 = arith.constant 0 : i32
    return %c0_i32, %c0_i32_0 : i32, i32
  }
  func.func @transform_2(%arg0: i32) -> (i32, i32) {
    %c0_i32 = arith.constant 0 : i32
    %c0_i32_0 = arith.constant 0 : i32
    %c0_i32_1 = arith.constant 0 : i32
    return %c0_i32, %c0_i32_0 : i32, i32
  }
  func.func @transform_3(%arg0: i32) -> (i32, i32) {
    %c0_i32 = arith.constant 0 : i32
    %c0_i32_0 = arith.constant 0 : i32
    %c0_i32_1 = arith.constant 0 : i32
    return %c0_i32, %c0_i32_0 : i32, i32
  }
  func.func @transform_4(%arg0: i32) -> (i32, i32) {
    %c0_i32 = arith.constant 0 : i32
    %c0_i32_0 = arith.constant 0 : i32
    %c0_i32_1 = arith.constant 0 : i32
    return %c0_i32, %c0_i32_0 : i32, i32
  }
  func.func @transform_5(%arg0: i32) -> (i32, i32) {
    %c0_i32 = arith.constant 0 : i32
    %c0_i32_0 = arith.constant 0 : i32
    %c0_i32_1 = arith.constant 0 : i32
    return %c0_i32, %c0_i32_0 : i32, i32
  }
  func.func @transform_6(%arg0: i32) -> (i32, i32) {
    %c0_i32 = arith.constant 0 : i32
    %c0_i32_0 = arith.constant 0 : i32
    %c0_i32_1 = arith.constant 0 : i32
    return %c0_i32, %c0_i32_0 : i32, i32
  }
  func.func @transform_7(%arg0: i32) -> (i32, i32) {
    %c0_i32 = arith.constant 0 : i32
    %c0_i32_0 = arith.constant 0 : i32
    %c0_i32_1 = arith.constant 0 : i32
    return %c0_i32, %c0_i32_0 : i32, i32
  }
  func.func @transform_8(%arg0: i32) -> (i32, i32) {
    %c0_i32 = arith.constant 0 : i32
    %c0_i32_0 = arith.constant 0 : i32
    %c0_i32_1 = arith.constant 0 : i32
    return %c0_i32, %c0_i32_0 : i32, i32
  }
  func.func @transform_9(%arg0: i32) -> (i32, i32) {
    %c0_i32 = arith.constant 0 : i32
    %c0_i32_0 = arith.constant 0 : i32
    %c0_i32_1 = arith.constant 0 : i32
    return %c0_i32, %c0_i32_0 : i32, i32
  }
  func.func @transform_10(%arg0: i32) -> (i32, i32) {
    %c0_i32 = arith.constant 0 : i32
    %c0_i32_0 = arith.constant 0 : i32
    %c0_i32_1 = arith.constant 0 : i32
    return %c0_i32, %c0_i32_0 : i32, i32
  }
  func.func @transform_11(%arg0: i32) -> (i32, i32) {
    %c0_i32 = arith.constant 0 : i32
    %c0_i32_0 = arith.constant 0 : i32
    %c0_i32_1 = arith.constant 0 : i32
    return %c0_i32, %c0_i32_0 : i32, i32
  }
  func.func @transform_12(%arg0: i32) -> (i32, i32) {
    %c0_i32 = arith.constant 0 : i32
    %c0_i32_0 = arith.constant 0 : i32
    %c0_i32_1 = arith.constant 0 : i32
    return %c0_i32, %c0_i32_0 : i32, i32
  }
  func.func @transform_13(%arg0: i32) -> (i32, i32) {
    %c0_i32 = arith.constant 0 : i32
    %c0_i32_0 = arith.constant 0 : i32
    return %arg0, %c0_i32 : i32, i32
  }
}

</mosaic_0001>

<llo_original>
// kernel: tpu_custom_call.1
$region0: #{tpu_custom_call.1}
  #allocation0 [shape = 'u32[]', space=smem, size = 0x4, offset = 0x4, fixed_abs, tag = 'smem constant byte address 0x4 - core index']
  #allocation1 [shape = 'u32[144,128]{1,0:T(1,128)}', space=vmem, size = 0x12000, scoped, tag = 'internal scratch']
  %s0 = inlined_call_operand.vmem [shape: f32[16,32], index: 0, kind: input, shape index: {}]
  %s1 = inlined_call_operand.vmem [shape: bf16[32,32], index: 1, kind: input, shape index: {}]
  %s2 = inlined_call_operand.vmem [shape: f32[32,1], index: 2, kind: input, shape index: {}]
  %s3 = inlined_call_operand.vmem [shape: bf16[32,32], index: 3, kind: input, shape index: {}]
  %s4 = inlined_call_operand.vmem [shape: f32[32,1], index: 4, kind: input, shape index: {}]
  %s5 = inlined_call_operand.vmem [shape: bf16[32,32], index: 5, kind: input, shape index: {}]
  %s6 = inlined_call_operand.vmem [shape: f32[32,1], index: 6, kind: input, shape index: {}]
  %s7 = inlined_call_operand.vmem [shape: bf16[32,32], index: 7, kind: input, shape index: {}]
  %s8 = inlined_call_operand.vmem [shape: f32[32,1], index: 8, kind: input, shape index: {}]
  %s9 = inlined_call_operand.vmem [shape: bf16[32,32], index: 9, kind: input, shape index: {}]
  %s10 = inlined_call_operand.vmem [shape: f32[32,1], index: 10, kind: input, shape index: {}]
  %s11 = inlined_call_operand.vmem [shape: bf16[32,32], index: 11, kind: input, shape index: {}]
  %s12 = inlined_call_operand.vmem [shape: f32[32,1], index: 12, kind: input, shape index: {}]
  %s13 = inlined_call_operand.hbm [shape: f32[16,32], index: 13, kind: output, shape index: {}]
  %s14 = sld [smem:[#allocation0]]
  $region62: #{tpu_custom_call.1} parent=0
    _
  %s16 = ssub.s32 1, %s14
  %s17 = scalar_select 0, %s16, %s14
  $region1: #{tpu_custom_call.1} parent=0
    #allocation2 [shape = 'u8[8192]{0}', space=vmem, size = 0x2000, scoped, tag = 'output window, operand 0, single buffered']
    #allocation3 [shape = 's32[1]{0}', space=sflag, size = 0x4, scoped, tag = 'scoped memory for tpu_custom_call.1']
    %18 = vsyncpa [#allocation3], 0
    // Predicated region
    $region2: #{tpu_custom_call.1} parent=1 // pred_check
      _
    $region3: #{tpu_custom_call.1} parent=1 // pred_check_branch
      %20 = sbr.rel (0) target = $region5
    $region4: #{tpu_custom_call.1} parent=1 // pred_region
      _
    $region5: #{tpu_custom_call.1} parent=1 // pred_fallthru
      _
    // Predicated region
    $region6: #{tpu_custom_call.1} parent=1 // pred_check
      _
    $region7: #{tpu_custom_call.1} parent=1 // pred_check_branch
      %22 = sbr.rel (0) target = $region9
    $region8: #{tpu_custom_call.1} parent=1 // pred_region
      _
    $region9: #{tpu_custom_call.1} parent=1 // pred_fallthru
      _
    // Predicated region
    $region10: #{tpu_custom_call.1} parent=1 // pred_check
      _
    $region11: #{tpu_custom_call.1} parent=1 // pred_check_branch
      %24 = sbr.rel (0) target = $region13
    $region12: #{tpu_custom_call.1} parent=1 // pred_region
      _
    $region13: #{tpu_custom_call.1} parent=1 // pred_fallthru
      _
    // Predicated region
    $region14: #{tpu_custom_call.1} parent=1 // pred_check
      _
    $region15: #{tpu_custom_call.1} parent=1 // pred_check_branch
      %26 = sbr.rel (0) target = $region17
    $region16: #{tpu_custom_call.1} parent=1 // pred_region
      _
    $region17: #{tpu_custom_call.1} parent=1 // pred_fallthru
      _
    // Predicated region
    $region18: #{tpu_custom_call.1} parent=1 // pred_check
      _
    $region19: #{tpu_custom_call.1} parent=1 // pred_check_branch
      %28 = sbr.rel (0) target = $region21
    $region20: #{tpu_custom_call.1} parent=1 // pred_region
      _
    $region21: #{tpu_custom_call.1} parent=1 // pred_fallthru
      _
    // Predicated region
    $region22: #{tpu_custom_call.1} parent=1 // pred_check
      _
    $region23: #{tpu_custom_call.1} parent=1 // pred_check_branch
      %30 = sbr.rel (0) target = $region25
    $region24: #{tpu_custom_call.1} parent=1 // pred_region
      _
    $region25: #{tpu_custom_call.1} parent=1 // pred_fallthru
      _
    // Predicated region
    $region26: #{tpu_custom_call.1} parent=1 // pred_check
      _
    $region27: #{tpu_custom_call.1} parent=1 // pred_check_branch
      %32 = sbr.rel (0) target = $region29
    $region28: #{tpu_custom_call.1} parent=1 // pred_region
      _
    $region29: #{tpu_custom_call.1} parent=1 // pred_fallthru
      _
    // Predicated region
    $region30: #{tpu_custom_call.1} parent=1 // pred_check
      _
    $region31: #{tpu_custom_call.1} parent=1 // pred_check_branch
      %34 = sbr.rel (0) target = $region33
    $region32: #{tpu_custom_call.1} parent=1 // pred_region
      _
    $region33: #{tpu_custom_call.1} parent=1 // pred_fallthru
      _
    // Predicated region
    $region34: #{tpu_custom_call.1} parent=1 // pred_check
      _
    $region35: #{tpu_custom_call.1} parent=1 // pred_check_branch
      %36 = sbr.rel (0) target = $region37
    $region36: #{tpu_custom_call.1} parent=1 // pred_region
      _
    $region37: #{tpu_custom_call.1} parent=1 // pred_fallthru
      _
    // Predicated region
    $region38: #{tpu_custom_call.1} parent=1 // pred_check
      _
    $region39: #{tpu_custom_call.1} parent=1 // pred_check_branch
      %38 = sbr.rel (0) target = $region41
    $region40: #{tpu_custom_call.1} parent=1 // pred_region
      _
    $region41: #{tpu_custom_call.1} parent=1 // pred_fallthru
      _
    // Predicated region
    $region42: #{tpu_custom_call.1} parent=1 // pred_check
      _
    $region43: #{tpu_custom_call.1} parent=1 // pred_check_branch
      %40 = sbr.rel (0) target = $region45
    $region44: #{tpu_custom_call.1} parent=1 // pred_region
      _
    $region45: #{tpu_custom_call.1} parent=1 // pred_fallthru
      _
    // Predicated region
    $region46: #{tpu_custom_call.1} parent=1 // pred_check
      _
    $region47: #{tpu_custom_call.1} parent=1 // pred_check_branch
      %42 = sbr.rel (0) target = $region49
    $region48: #{tpu_custom_call.1} parent=1 // pred_region
      _
    $region49: #{tpu_custom_call.1} parent=1 // pred_fallthru
      _
    // Predicated region
    $region50: #{tpu_custom_call.1} parent=1 // pred_check
      _
    $region51: #{tpu_custom_call.1} parent=1 // pred_check_branch
      %44 = sbr.rel (0) target = $region53
    $region52: #{tpu_custom_call.1} parent=1 // pred_region
      _
    $region53: #{tpu_custom_call.1} parent=1 // pred_fallthru
      _
    %v46 = vld [vmem:[%s0] sm:$0xff]
    %v47 = vld [vmem:[%s0 + $0x8] sm:$0xff]
    %v48 = vpack.c.bf16 %v47, %v46
    %v49 = vld [vmem:[%s1] sm:$0xf]
    %v50 = vld [vmem:[%s1 + $0x4] sm:$0xf]
    %v51 = vld [vmem:[%s1 + $0x8] sm:$0xf]
    %v52 = vld [vmem:[%s1 + $0xc] sm:$0xf]
    %v53 = vld [vmem:[%s2] sm:$0xff]
    %v54 = vld [vmem:[%s2 + $0x8] sm:$0xff]
    %v55 = vld [vmem:[%s2 + $0x10] sm:$0xff]
    %v56 = vld [vmem:[%s2 + $0x18] sm:$0xff]
    %58 = vset.pattern.permute.xlu0 0
    %59 = vperm.xlu0 %58, %v53
    %v60 = vpop.permute.xlu0 %59
    %63 = vset.pattern.permute.xlu0 0
    %64 = vperm.xlu0 %63, %v54
    %v65 = vpop.permute.xlu0 %64
    %68 = vset.pattern.permute.xlu0 0
    %69 = vperm.xlu0 %68, %v55
    %v70 = vpop.permute.xlu0 %69
    %73 = vset.pattern.permute.xlu0 0
    %74 = vperm.xlu0 %73, %v56
    %v75 = vpop.permute.xlu0 %74
    %v81 = vunpack.c.l.b16 %v49
    %v82 = vunpack.c.l.b16 %v50
    %v83 = vunpack.c.l.b16 %v51
    %v84 = vunpack.c.l.b16 %v52
    %v85 = vpack.c.b16 %v82, %v81
    %v86 = vpack.c.b16 %v84, %v83
    %vm87 = vcmask 261120
    %v89 = vsel %vm87, %v85, 0
    %v92 = vsel %vm87, %v86, 0
    %v95 = vsel %vm87, %v48, 0
    %97 = vmatprep.subr.bf16.mxu0 0
    %98 = vmatpush1.bf16.xpose.msra.mxu0 %v95
    %99 = vmatprep.subr.bf16.mxu0 0
    %100 = vmatpush1.bf16.xpose.msra.mxu0 0
    %101 = vmatprep.subr.bf16.mxu0 0
    %102 = vmatpush1.bf16.xpose.msra.mxu0 0
    %103 = vmatprep.subr.bf16.mxu0 0
    %104 = vmatpush1.bf16.xpose.msra.mxu0 0
    %105 = vmatprep.subr.bf16.mxu0 0
    %106 = vmatpush1.bf16.xpose.msra.mxu0 0
    %107 = vmatprep.subr.bf16.mxu0 0
    %108 = vmatpush1.bf16.xpose.msra.mxu0 0
    %109 = vmatprep.subr.bf16.mxu0 0
    %110 = vmatpush1.bf16.xpose.msra.mxu0 0
    %111 = vmatprep.subr.bf16.mxu0 0
    %112 = vmatpush1.bf16.xpose.msra.mxu0 0
    %113 = vmatprep.subr.bf16.mxu0 0
    %114 = vmatpush1.bf16.xpose.msra.mxu0 0
    %115 = vmatprep.subr.bf16.mxu0 0
    %116 = vmatpush1.bf16.xpose.msra.mxu0 0
    %117 = vmatprep.subr.bf16.mxu0 0
    %118 = vmatpush1.bf16.xpose.msra.mxu0 0
    %119 = vmatprep.subr.bf16.mxu0 0
    %120 = vmatpush1.bf16.xpose.msra.mxu0 0
    %121 = vmatprep.subr.bf16.mxu0 0
    %122 = vmatpush1.bf16.xpose.msra.mxu0 0
    %123 = vmatprep.subr.bf16.mxu0 0
    %124 = vmatpush1.bf16.xpose.msra.mxu0 0
    %125 = vmatprep.subr.bf16.mxu0 0
    %126 = vmatpush1.bf16.xpose.msra.mxu0 0
    %127 = vmatprep.subr.bf16.mxu0 0
    %128 = vmatpush1.bf16.xpose.msra.mxu0 0
    %129 = vmatprep.mubr.bf16.mxu0 0
    %130 = vmatmul.mubr.bf16.gmra.mrb[0].mxu0 %v89
    %v131 = vpop.f32.mrb[0].mxu0
    %v132 = vadd.f32 %v60, %v131
    %v133 = vpop.f32.mrb[0].mxu0
    %v134 = vpop.f32.mrb[0].mxu0
    %v135 = vadd.f32 %v65, %v134
    %v136 = vpop.f32.mrb[0].mxu0
    %137 = vmatprep.mubr.bf16.mxu0 0
    %138 = vmatmul.mubr.bf16.gmra.mrb[0].mxu0 %v92
    %v139 = vpop.f32.mrb[0].mxu0
    %v140 = vadd.f32 %v70, %v139
    %v141 = vpop.f32.mrb[0].mxu0
    %v142 = vpop.f32.mrb[0].mxu0
    %v143 = vadd.f32 %v75, %v142
    %v144 = vpop.f32.mrb[0].mxu0
    %145 = vdwg.mxu0
    %v146 = vmax.f32 %v132, 0.0
    %v147 = vmax.f32 %v135, 0.0
    %v148 = vmax.f32 %v140, 0.0
    %v149 = vmax.f32 %v143, 0.0
    %v150 = vld [vmem:[%s3] sm:$0xf]
    %v151 = vld [vmem:[%s3 + $0x4] sm:$0xf]
    %v152 = vld [vmem:[%s3 + $0x8] sm:$0xf]
    %v153 = vld [vmem:[%s3 + $0xc] sm:$0xf]
    %v154 = vpack.c.bf16 %v147, %v146
    %v155 = vpack.c.bf16 %v149, %v148
    %v156 = vld [vmem:[%s4] sm:$0xff]
    %v157 = vld [vmem:[%s4 + $0x8] sm:$0xff]
    %v158 = vld [vmem:[%s4 + $0x10] sm:$0xff]
    %v159 = vld [vmem:[%s4 + $0x18] sm:$0xff]
    %161 = vset.pattern.permute.xlu0 0
    %162 = vperm.xlu0 %161, %v156
    %v163 = vpop.permute.xlu0 %162
    %166 = vset.pattern.permute.xlu0 0
    %167 = vperm.xlu0 %166, %v157
    %v168 = vpop.permute.xlu0 %167
    %171 = vset.pattern.permute.xlu0 0
    %172 = vperm.xlu0 %171, %v158
    %v173 = vpop.permute.xlu0 %172
    %176 = vset.pattern.permute.xlu0 0
    %177 = vperm.xlu0 %176, %v159
    %v178 = vpop.permute.xlu0 %177
    %v184 = vunpack.c.l.b16 %v150
    %v185 = vunpack.c.l.b16 %v151
    %v186 = vunpack.c.l.b16 %v152
    %v187 = vunpack.c.l.b16 %v153
    %v188 = vpack.c.b16 %v185, %v184
    %v189 = vpack.c.b16 %v187, %v186
    %v191 = vsel %vm87, %v188, 0
    %v194 = vsel %vm87, %v189, 0
    %196 = vmatprep.subr.bf16.mxu0 0
    %197 = vmatpush1.bf16.msra.mxu0 %v154
    %198 = vmatprep.subr.bf16.mxu0 0
    %199 = vmatpush1.bf16.msra.mxu0 %v155
    %200 = vmatprep.subr.bf16.mxu0 0
    %201 = vmatpush1.bf16.msra.mxu0 0
    %202 = vmatprep.subr.bf16.mxu0 0
    %203 = vmatpush1.bf16.msra.mxu0 0
    %204 = vmatprep.subr.bf16.mxu0 0
    %205 = vmatpush1.bf16.msra.mxu0 0
    %206 = vmatprep.subr.bf16.mxu0 0
    %207 = vmatpush1.bf16.msra.mxu0 0
    %208 = vmatprep.subr.bf16.mxu0 0
    %209 = vmatpush1.bf16.msra.mxu0 0
    %210 = vmatprep.subr.bf16.mxu0 0
    %211 = vmatpush1.bf16.msra.mxu0 0
    %212 = vmatprep.subr.bf16.mxu0 0
    %213 = vmatpush1.bf16.msra.mxu0 0
    %214 = vmatprep.subr.bf16.mxu0 0
    %215 = vmatpush1.bf16.msra.mxu0 0
    %216 = vmatprep.subr.bf16.mxu0 0
    %217 = vmatpush1.bf16.msra.mxu0 0
    %218 = vmatprep.subr.bf16.mxu0 0
    %219 = vmatpush1.bf16.msra.mxu0 0
    %220 = vmatprep.subr.bf16.mxu0 0
    %221 = vmatpush1.bf16.msra.mxu0 0
    %222 = vmatprep.subr.bf16.mxu0 0
    %223 = vmatpush1.bf16.msra.mxu0 0
    %224 = vmatprep.subr.bf16.mxu0 0
    %225 = vmatpush1.bf16.msra.mxu0 0
    %226 = vmatprep.subr.bf16.mxu0 0
    %227 = vmatpush1.bf16.msra.mxu0 0
    %228 = vmatprep.mubr.bf16.mxu0 0
    %229 = vmatmul.mubr.bf16.gmra.mrb[0].mxu0 %v191
    %v230 = vpop.f32.mrb[0].mxu0
    %v231 = vadd.f32 %v163, %v230
    %v232 = vpop.f32.mrb[0].mxu0
    %v233 = vpop.f32.mrb[0].mxu0
    %v234 = vadd.f32 %v168, %v233
    %v235 = vpop.f32.mrb[0].mxu0
    %236 = vmatprep.mubr.bf16.mxu0 0
    %237 = vmatmul.mubr.bf16.gmra.mrb[0].mxu0 %v194
    %v238 = vpop.f32.mrb[0].mxu0
    %v239 = vadd.f32 %v173, %v238
    %v240 = vpop.f32.mrb[0].mxu0
    %v241 = vpop.f32.mrb[0].mxu0
    %v242 = vadd.f32 %v178, %v241
    %v243 = vpop.f32.mrb[0].mxu0
    %244 = vdwg.mxu0
    %v245 = vmax.f32 %v231, 0.0
    %v246 = vmax.f32 %v234, 0.0
    %v247 = vmax.f32 %v239, 0.0
    %v248 = vmax.f32 %v242, 0.0
    %v249 = vld [vmem:[%s5] sm:$0xf]
    %v250 = vld [vmem:[%s5 + $0x4] sm:$0xf]
    %v251 = vld [vmem:[%s5 + $0x8] sm:$0xf]
    %v252 = vld [vmem:[%s5 + $0xc] sm:$0xf]
    %v253 = vpack.c.bf16 %v246, %v245
    %v254 = vpack.c.bf16 %v248, %v247
    %v255 = vld [vmem:[%s6] sm:$0xff]
    %v256 = vld [vmem:[%s6 + $0x8] sm:$0xff]
    %v257 = vld [vmem:[%s6 + $0x10] sm:$0xff]
    %v258 = vld [vmem:[%s6 + $0x18] sm:$0xff]
    %260 = vset.pattern.permute.xlu0 0
    %261 = vperm.xlu0 %260, %v255
    %v262 = vpop.permute.xlu0 %261
    %265 = vset.pattern.permute.xlu0 0
    %266 = vperm.xlu0 %265, %v256
    %v267 = vpop.permute.xlu0 %266
    %270 = vset.pattern.permute.xlu0 0
    %271 = vperm.xlu0 %270, %v257
    %v272 = vpop.permute.xlu0 %271
    %275 = vset.pattern.permute.xlu0 0
    %276 = vperm.xlu0 %275, %v258
    %v277 = vpop.permute.xlu0 %276
    %v283 = vunpack.c.l.b16 %v249
    %v284 = vunpack.c.l.b16 %v250
    %v285 = vunpack.c.l.b16 %v251
    %v286 = vunpack.c.l.b16 %v252
    %v287 = vpack.c.b16 %v284, %v283
    %v288 = vpack.c.b16 %v286, %v285
    %v290 = vsel %vm87, %v287, 0
    %v293 = vsel %vm87, %v288, 0
    %295 = vmatprep.subr.bf16.mxu0 0
    %296 = vmatpush1.bf16.msra.mxu0 %v253
    %297 = vmatprep.subr.bf16.mxu0 0
    %298 = vmatpush1.bf16.msra.mxu0 %v254
    %299 = vmatprep.subr.bf16.mxu0 0
    %300 = vmatpush1.bf16.msra.mxu0 0
    %301 = vmatprep.subr.bf16.mxu0 0
    %302 = vmatpush1.bf16.msra.mxu0 0
    %303 = vmatprep.subr.bf16.mxu0 0
    %304 = vmatpush1.bf16.msra.mxu0 0
    %305 = vmatprep.subr.bf16.mxu0 0
    %306 = vmatpush1.bf16.msra.mxu0 0
    %307 = vmatprep.subr.bf16.mxu0 0
    %308 = vmatpush1.bf16.msra.mxu0 0
    %309 = vmatprep.subr.bf16.mxu0 0
    %310 = vmatpush1.bf16.msra.mxu0 0
    %311 = vmatprep.subr.bf16.mxu0 0
    %312 = vmatpush1.bf16.msra.mxu0 0
    %313 = vmatprep.subr.bf16.mxu0 0
    %314 = vmatpush1.bf16.msra.mxu0 0
    %315 = vmatprep.subr.bf16.mxu0 0
    %316 = vmatpush1.bf16.msra.mxu0 0
    %317 = vmatprep.subr.bf16.mxu0 0
    %318 = vmatpush1.bf16.msra.mxu0 0
    %319 = vmatprep.subr.bf16.mxu0 0
    %320 = vmatpush1.bf16.msra.mxu0 0
    %321 = vmatprep.subr.bf16.mxu0 0
    %322 = vmatpush1.bf16.msra.mxu0 0
    %323 = vmatprep.subr.bf16.mxu0 0
    %324 = vmatpush1.bf16.msra.mxu0 0
    %325 = vmatprep.subr.bf16.mxu0 0
    %326 = vmatpush1.bf16.msra.mxu0 0
    %327 = vmatprep.mubr.bf16.mxu0 0
    %328 = vmatmul.mubr.bf16.gmra.mrb[0].mxu0 %v290
    %v329 = vpop.f32.mrb[0].mxu0
    %v330 = vadd.f32 %v262, %v329
    %v331 = vpop.f32.mrb[0].mxu0
    %v332 = vpop.f32.mrb[0].mxu0
    %v333 = vadd.f32 %v267, %v332
    %v334 = vpop.f32.mrb[0].mxu0
    %335 = vmatprep.mubr.bf16.mxu0 0
    %336 = vmatmul.mubr.bf16.gmra.mrb[0].mxu0 %v293
    %v337 = vpop.f32.mrb[0].mxu0
    %v338 = vadd.f32 %v272, %v337
    %v339 = vpop.f32.mrb[0].mxu0
    %v340 = vpop.f32.mrb[0].mxu0
    %v341 = vadd.f32 %v277, %v340
    %v342 = vpop.f32.mrb[0].mxu0
    %343 = vdwg.mxu0
    %v344 = vmax.f32 %v330, 0.0
    %v345 = vmax.f32 %v333, 0.0
    %v346 = vmax.f32 %v338, 0.0
    %v347 = vmax.f32 %v341, 0.0
    %v348 = vld [vmem:[%s7] sm:$0xf]
    %v349 = vld [vmem:[%s7 + $0x4] sm:$0xf]
    %v350 = vld [vmem:[%s7 + $0x8] sm:$0xf]
    %v351 = vld [vmem:[%s7 + $0xc] sm:$0xf]
    %v352 = vpack.c.bf16 %v345, %v344
    %v353 = vpack.c.bf16 %v347, %v346
    %v354 = vld [vmem:[%s8] sm:$0xff]
    %v355 = vld [vmem:[%s8 + $0x8] sm:$0xff]
    %v356 = vld [vmem:[%s8 + $0x10] sm:$0xff]
    %v357 = vld [vmem:[%s8 + $0x18] sm:$0xff]
    %359 = vset.pattern.permute.xlu0 0
    %360 = vperm.xlu0 %359, %v354
    %v361 = vpop.permute.xlu0 %360
    %364 = vset.pattern.permute.xlu0 0
    %365 = vperm.xlu0 %364, %v355
    %v366 = vpop.permute.xlu0 %365
    %369 = vset.pattern.permute.xlu0 0
    %370 = vperm.xlu0 %369, %v356
    %v371 = vpop.permute.xlu0 %370
    %374 = vset.pattern.permute.xlu0 0
    %375 = vperm.xlu0 %374, %v357
    %v376 = vpop.permute.xlu0 %375
    %v382 = vunpack.c.l.b16 %v348
    %v383 = vunpack.c.l.b16 %v349
    %v384 = vunpack.c.l.b16 %v350
    %v385 = vunpack.c.l.b16 %v351
    %v386 = vpack.c.b16 %v383, %v382
    %v387 = vpack.c.b16 %v385, %v384
    %v389 = vsel %vm87, %v386, 0
    %v392 = vsel %vm87, %v387, 0
    %394 = vmatprep.subr.bf16.mxu0 0
    %395 = vmatpush1.bf16.msra.mxu0 %v352
    %396 = vmatprep.subr.bf16.mxu0 0
    %397 = vmatpush1.bf16.msra.mxu0 %v353
    %398 = vmatprep.subr.bf16.mxu0 0
    %399 = vmatpush1.bf16.msra.mxu0 0
    %400 = vmatprep.subr.bf16.mxu0 0
    %401 = vmatpush1.bf16.msra.mxu0 0
    %402 = vmatprep.subr.bf16.mxu0 0
    %403 = vmatpush1.bf16.msra.mxu0 0
    %404 = vmatprep.subr.bf16.mxu0 0
    %405 = vmatpush1.bf16.msra.mxu0 0
    %406 = vmatprep.subr.bf16.mxu0 0
    %407 = vmatpush1.bf16.msra.mxu0 0
    %408 = vmatprep.subr.bf16.mxu0 0
    %409 = vmatpush1.bf16.msra.mxu0 0
    %410 = vmatprep.subr.bf16.mxu0 0
    %411 = vmatpush1.bf16.msra.mxu0 0
    %412 = vmatprep.subr.bf16.mxu0 0
    %413 = vmatpush1.bf16.msra.mxu0 0
    %414 = vmatprep.subr.bf16.mxu0 0
    %415 = vmatpush1.bf16.msra.mxu0 0
    %416 = vmatprep.subr.bf16.mxu0 0
    %417 = vmatpush1.bf16.msra.mxu0 0
    %418 = vmatprep.subr.bf16.mxu0 0
    %419 = vmatpush1.bf16.msra.mxu0 0
    %420 = vmatprep.subr.bf16.mxu0 0
    %421 = vmatpush1.bf16.msra.mxu0 0
    %422 = vmatprep.subr.bf16.mxu0 0
    %423 = vmatpush1.bf16.msra.mxu0 0
    %424 = vmatprep.subr.bf16.mxu0 0
    %425 = vmatpush1.bf16.msra.mxu0 0
    %426 = vmatprep.mubr.bf16.mxu0 0
    %427 = vmatmul.mubr.bf16.gmra.mrb[0].mxu0 %v389
    %v428 = vpop.f32.mrb[0].mxu0
    %v429 = vadd.f32 %v361, %v428
    %v430 = vpop.f32.mrb[0].mxu0
    %v431 = vpop.f32.mrb[0].mxu0
    %v432 = vadd.f32 %v366, %v431
    %v433 = vpop.f32.mrb[0].mxu0
    %434 = vmatprep.mubr.bf16.mxu0 0
    %435 = vmatmul.mubr.bf16.gmra.mrb[0].mxu0 %v392
    %v436 = vpop.f32.mrb[0].mxu0
    %v437 = vadd.f32 %v371, %v436
    %v438 = vpop.f32.mrb[0].mxu0
    %v439 = vpop.f32.mrb[0].mxu0
    %v440 = vadd.f32 %v376, %v439
    %v441 = vpop.f32.mrb[0].mxu0
    %442 = vdwg.mxu0
    %v443 = vmax.f32 %v429, 0.0
    %v444 = vmax.f32 %v432, 0.0
    %v445 = vmax.f32 %v437, 0.0
    %v446 = vmax.f32 %v440, 0.0
    %v447 = vld [vmem:[%s9] sm:$0xf]
    %v448 = vld [vmem:[%s9 + $0x4] sm:$0xf]
    %v449 = vld [vmem:[%s9 + $0x8] sm:$0xf]
    %v450 = vld [vmem:[%s9 + $0xc] sm:$0xf]
    %v451 = vpack.c.bf16 %v444, %v443
    %v452 = vpack.c.bf16 %v446, %v445
    %v453 = vld [vmem:[%s10] sm:$0xff]
    %v454 = vld [vmem:[%s10 + $0x8] sm:$0xff]
    %v455 = vld [vmem:[%s10 + $0x10] sm:$0xff]
    %v456 = vld [vmem:[%s10 + $0x18] sm:$0xff]
    %458 = vset.pattern.permute.xlu0 0
    %459 = vperm.xlu0 %458, %v453
    %v460 = vpop.permute.xlu0 %459
    %463 = vset.pattern.permute.xlu0 0
    %464 = vperm.xlu0 %463, %v454
    %v465 = vpop.permute.xlu0 %464
    %468 = vset.pattern.permute.xlu0 0
    %469 = vperm.xlu0 %468, %v455
    %v470 = vpop.permute.xlu0 %469
    %473 = vset.pattern.permute.xlu0 0
    %474 = vperm.xlu0 %473, %v456
    %v475 = vpop.permute.xlu0 %474
    %v481 = vunpack.c.l.b16 %v447
    %v482 = vunpack.c.l.b16 %v448
    %v483 = vunpack.c.l.b16 %v449
    %v484 = vunpack.c.l.b16 %v450
    %v485 = vpack.c.b16 %v482, %v481
    %v486 = vpack.c.b16 %v484, %v483
    %v488 = vsel %vm87, %v485, 0
    %v491 = vsel %vm87, %v486, 0
    %493 = vmatprep.subr.bf16.mxu0 0
    %494 = vmatpush1.bf16.msra.mxu0 %v451
    %495 = vmatprep.subr.bf16.mxu0 0
    %496 = vmatpush1.bf16.msra.mxu0 %v452
    %497 = vmatprep.subr.bf16.mxu0 0
    %498 = vmatpush1.bf16.msra.mxu0 0
    %499 = vmatprep.subr.bf16.mxu0 0
    %500 = vmatpush1.bf16.msra.mxu0 0
    %501 = vmatprep.subr.bf16.mxu0 0
    %502 = vmatpush1.bf16.msra.mxu0 0
    %503 = vmatprep.subr.bf16.mxu0 0
    %504 = vmatpush1.bf16.msra.mxu0 0
    %505 = vmatprep.subr.bf16.mxu0 0
    %506 = vmatpush1.bf16.msra.mxu0 0
    %507 = vmatprep.subr.bf16.mxu0 0
    %508 = vmatpush1.bf16.msra.mxu0 0
    %509 = vmatprep.subr.bf16.mxu0 0
    %510 = vmatpush1.bf16.msra.mxu0 0
    %511 = vmatprep.subr.bf16.mxu0 0
    %512 = vmatpush1.bf16.msra.mxu0 0
    %513 = vmatprep.subr.bf16.mxu0 0
    %514 = vmatpush1.bf16.msra.mxu0 0
    %515 = vmatprep.subr.bf16.mxu0 0
    %516 = vmatpush1.bf16.msra.mxu0 0
    %517 = vmatprep.subr.bf16.mxu0 0
    %518 = vmatpush1.bf16.msra.mxu0 0
    %519 = vmatprep.subr.bf16.mxu0 0
    %520 = vmatpush1.bf16.msra.mxu0 0
    %521 = vmatprep.subr.bf16.mxu0 0
    %522 = vmatpush1.bf16.msra.mxu0 0
    %523 = vmatprep.subr.bf16.mxu0 0
    %524 = vmatpush1.bf16.msra.mxu0 0
    %525 = vmatprep.mubr.bf16.mxu0 0
    %526 = vmatmul.mubr.bf16.gmra.mrb[0].mxu0 %v488
    %v527 = vpop.f32.mrb[0].mxu0
    %v528 = vadd.f32 %v460, %v527
    %v529 = vpop.f32.mrb[0].mxu0
    %v530 = vpop.f32.mrb[0].mxu0
    %v531 = vadd.f32 %v465, %v530
    %v532 = vpop.f32.mrb[0].mxu0
    %533 = vmatprep.mubr.bf16.mxu0 0
    %534 = vmatmul.mubr.bf16.gmra.mrb[0].mxu0 %v491
    %v535 = vpop.f32.mrb[0].mxu0
    %v536 = vadd.f32 %v470, %v535
    %v537 = vpop.f32.mrb[0].mxu0
    %v538 = vpop.f32.mrb[0].mxu0
    %v539 = vadd.f32 %v475, %v538
    %v540 = vpop.f32.mrb[0].mxu0
    %541 = vdwg.mxu0
    %v542 = vmax.f32 %v528, 0.0
    %v543 = vmax.f32 %v531, 0.0
    %v544 = vmax.f32 %v536, 0.0
    %v545 = vmax.f32 %v539, 0.0
    %v546 = vld [vmem:[%s11] sm:$0xf]
    %v547 = vld [vmem:[%s11 + $0x4] sm:$0xf]
    %v548 = vld [vmem:[%s11 + $0x8] sm:$0xf]
    %v549 = vld [vmem:[%s11 + $0xc] sm:$0xf]
    %v550 = vpack.c.bf16 %v543, %v542
    %v551 = vpack.c.bf16 %v545, %v544
    %v552 = vld [vmem:[%s12] sm:$0xff]
    %v553 = vld [vmem:[%s12 + $0x8] sm:$0xff]
    %v554 = vld [vmem:[%s12 + $0x10] sm:$0xff]
    %v555 = vld [vmem:[%s12 + $0x18] sm:$0xff]
    %557 = vset.pattern.permute.xlu0 0
    %558 = vperm.xlu0 %557, %v552
    %v559 = vpop.permute.xlu0 %558
    %562 = vset.pattern.permute.xlu0 0
    %563 = vperm.xlu0 %562, %v553
    %v564 = vpop.permute.xlu0 %563
    %567 = vset.pattern.permute.xlu0 0
    %568 = vperm.xlu0 %567, %v554
    %v569 = vpop.permute.xlu0 %568
    %572 = vset.pattern.permute.xlu0 0
    %573 = vperm.xlu0 %572, %v555
    %v574 = vpop.permute.xlu0 %573
    %v580 = vunpack.c.l.b16 %v546
    %v581 = vunpack.c.l.b16 %v547
    %v582 = vunpack.c.l.b16 %v548
    %v583 = vunpack.c.l.b16 %v549
    %v584 = vpack.c.b16 %v581, %v580
    %v585 = vpack.c.b16 %v583, %v582
    %v587 = vsel %vm87, %v584, 0
    %v590 = vsel %vm87, %v585, 0
    %592 = vmatprep.subr.bf16.mxu0 0
    %593 = vmatpush1.bf16.msra.mxu0 %v550
    %594 = vmatprep.subr.bf16.mxu0 0
    %595 = vmatpush1.bf16.msra.mxu0 %v551
    %596 = vmatprep.subr.bf16.mxu0 0
    %597 = vmatpush1.bf16.msra.mxu0 0
    %598 = vmatprep.subr.bf16.mxu0 0
    %599 = vmatpush1.bf16.msra.mxu0 0
    %600 = vmatprep.subr.bf16.mxu0 0
    %601 = vmatpush1.bf16.msra.mxu0 0
    %602 = vmatprep.subr.bf16.mxu0 0
    %603 = vmatpush1.bf16.msra.mxu0 0
    %604 = vmatprep.subr.bf16.mxu0 0
    %605 = vmatpush1.bf16.msra.mxu0 0
    %606 = vmatprep.subr.bf16.mxu0 0
    %607 = vmatpush1.bf16.msra.mxu0 0
    %608 = vmatprep.subr.bf16.mxu0 0
    %609 = vmatpush1.bf16.msra.mxu0 0
    %610 = vmatprep.subr.bf16.mxu0 0
    %611 = vmatpush1.bf16.msra.mxu0 0
    %612 = vmatprep.subr.bf16.mxu0 0
    %613 = vmatpush1.bf16.msra.mxu0 0
    %614 = vmatprep.subr.bf16.mxu0 0
    %615 = vmatpush1.bf16.msra.mxu0 0
    %616 = vmatprep.subr.bf16.mxu0 0
    %617 = vmatpush1.bf16.msra.mxu0 0
    %618 = vmatprep.subr.bf16.mxu0 0
    %619 = vmatpush1.bf16.msra.mxu0 0
    %620 = vmatprep.subr.bf16.mxu0 0
    %621 = vmatpush1.bf16.msra.mxu0 0
    %622 = vmatprep.subr.bf16.mxu0 0
    %623 = vmatpush1.bf16.msra.mxu0 0
    %624 = vmatprep.mubr.bf16.mxu0 0
    %625 = vmatmul.mubr.bf16.gmra.mrb[0].mxu0 %v587
    %v626 = vpop.f32.mrb[0].mxu0
    %v627 = vadd.f32 %v559, %v626
    %v628 = vpop.f32.mrb[0].mxu0
    %v629 = vpop.f32.mrb[0].mxu0
    %v630 = vadd.f32 %v564, %v629
    %v631 = vpop.f32.mrb[0].mxu0
    %632 = vmatprep.mubr.bf16.mxu0 0
    %633 = vmatmul.mubr.bf16.gmra.mrb[0].mxu0 %v590
    %v634 = vpop.f32.mrb[0].mxu0
    %v635 = vadd.f32 %v569, %v634
    %v636 = vpop.f32.mrb[0].mxu0
    %v637 = vpop.f32.mrb[0].mxu0
    %v638 = vadd.f32 %v574, %v637
    %v639 = vpop.f32.mrb[0].mxu0
    %640 = vdwg.mxu0
    %v641 = vsub.f32 0.0, %v627
    %v642 = vsub.f32 0.0, %v630
    %v643 = vsub.f32 0.0, %v635
    %v644 = vsub.f32 0.0, %v638
    %v645 = vmul.f32 %v641, 1.442695
    %v646 = vpow.pop %v645
    %v647 = vmul.f32 %v642, 1.442695
    %v648 = vpow.pop %v647
    %v649 = vmul.f32 %v643, 1.442695
    %v650 = vpow.pop %v649
    %v651 = vmul.f32 %v644, 1.442695
    %v652 = vpow.pop %v651
    %v653 = vadd.f32 %v646, 1.0
    %v654 = vadd.f32 %v648, 1.0
    %v655 = vadd.f32 %v650, 1.0
    %v656 = vadd.f32 %v652, 1.0
    %v657 = vrcp.pop %v653
    %v658 = vrcp.pop %v654
    %v659 = vrcp.pop %v655
    %v660 = vrcp.pop %v656
    %661 = vxpose.xlu0.b32.start [1/16] %v657, 128
    %662 = vxpose.xlu0.b32.cont [2/16] %v658, 128
    %663 = vxpose.xlu0.b32.cont [3/16] %v659, 128
    %664 = vxpose.xlu0.b32.cont [4/16] %v660, 128
    %665 = vxpose.xlu0.b32.cont [5/16] 0.0, 128
    %666 = vxpose.xlu0.b32.cont [6/16] 0.0, 128
    %667 = vxpose.xlu0.b32.cont [7/16] 0.0, 128
    %668 = vxpose.xlu0.b32.cont [8/16] 0.0, 128
    %669 = vxpose.xlu0.b32.cont [9/16] 0.0, 128
    %670 = vxpose.xlu0.b32.cont [10/16] 0.0, 128
    %671 = vxpose.xlu0.b32.cont [11/16] 0.0, 128
    %672 = vxpose.xlu0.b32.cont [12/16] 0.0, 128
    %673 = vxpose.xlu0.b32.cont [13/16] 0.0, 128
    %674 = vxpose.xlu0.b32.cont [14/16] 0.0, 128
    %675 = vxpose.xlu0.b32.cont [15/16] 0.0, 128
    %676 = vxpose.xlu0.b32.end [16/16] 0.0, 128
    %v677 = vpop.trf.xlu0
    %v678 = vpop.trf.xlu0
    %v679 = vpop.trf.xlu0
    %v680 = vpop.trf.xlu0
    %v681 = vpop.trf.xlu0
    %v682 = vpop.trf.xlu0
    %v683 = vpop.trf.xlu0
    %v684 = vpop.trf.xlu0
    %v685 = vpop.trf.xlu0
    %v686 = vpop.trf.xlu0
    %v687 = vpop.trf.xlu0
    %v688 = vpop.trf.xlu0
    %v689 = vpop.trf.xlu0
    %v690 = vpop.trf.xlu0
    %v691 = vpop.trf.xlu0
    %v692 = vpop.trf.xlu0
    %693 = vst.msk [vmem:[#allocation2] sm:$0xff] %vm87, %v677
    %694 = vst.msk [vmem:[#allocation2 + $0x8] sm:$0xff] %vm87, %v678
    // Predicated region
    $region54: #{tpu_custom_call.1} parent=1 // pred_check
      _
    $region55: #{tpu_custom_call.1} parent=1 // pred_check_branch
      %696 = sbr.rel (0) target = $region57
    $region56: #{tpu_custom_call.1} parent=1 // pred_region
      %s698 = ssub.s32 256, 256
      %699 = vsyncadd [#allocation3], %s698
      %s700 = sshll.u32 [#allocation2], 4
      %s701 = int_to_ptr.vmem [resolvable:$true] %s700
      %706 = dma.vmem_to_hbm [thread:$0]  %s701, 256, %s13, [#allocation3], 128, 128, 8
    $region57: #{tpu_custom_call.1} parent=1 // pred_fallthru
      _
    // Predicated region
    $region58: #{tpu_custom_call.1} parent=1 // pred_check
      _
    $region59: #{tpu_custom_call.1} parent=1 // pred_check_branch
      %708 = sbr.rel (0) target = $region61
    $region60: #{tpu_custom_call.1} parent=1 // pred_region
      %709 = dma.done [#allocation3], 256
    $region61: #{tpu_custom_call.1} parent=1 // pred_fallthru
      _
    %710 = vsyncpa [#allocation3], 1

</llo_original>
